<compile_context>
chip_gen: v7x
topology: tpu7x:2x2x1
jax: 0.10.0
libtpu: 0.0.40
codegen_flags: <defaults>
</compile_context>

<pallas_src>
import functools
import inspect

import jax
import jax.numpy as jnp
from jax.experimental import pallas as pl
from jax.experimental.pallas import tpu as pltpu

_MIB = 1024 * 1024


def same_padding(kernel_size, stride):
    # dtk convention.
    return kernel_size - stride


def _round_up(a, b):
    return (a + b - 1) // b * b


def _vmem_budget_bytes(headroom_bytes=16 * _MIB):
    """Generation-aware VMEM budget: physical capacity minus headroom."""
    try:
        cap = int(pltpu.get_tpu_info().vmem_capacity_bytes)   # 128 MiB v5e/v6e, 64 MiB v7x
    except Exception:
        cap = 64 * _MIB                                        # v7x-safe lower bound
    return max(cap - headroom_bytes, 32 * _MIB)


def _supports_pipeline_mode():
    """pl.BlockSpec(pipeline_mode=...) exists only on recent jax versions."""
    try:
        return (hasattr(pl, "Buffered")
                and "pipeline_mode" in inspect.signature(pl.BlockSpec).parameters)
    except (TypeError, ValueError):
        return False


def _conv1d_kernel(x_ref, w_ref, o_ref, *, K, L_t, single_l_tile):
    # x_ref : (1, C_in, L_in)   zero-padded input row, resident (changes once per n)
    # w_ref : (K, C_out, C_in)  resident weight, one (C_out, C_in) slab per tap
    # o_ref : (1, C_out, L_t)   lane-dense output tile
    if single_l_tile:
        start = 0                                           # fully static addressing
    else:
        start = pl.multiple_of(pl.program_id(1) * L_t, 128)
    acc = None
    for k in range(K):                                      # K is small; unrolled
        xk = x_ref[0, :, pl.ds(start + k, L_t)]             # (C_in, L_t)
        part = jnp.dot(w_ref[k], xk, preferred_element_type=jnp.float32)
        acc = part if acc is None else acc + part
    o_ref[0] = acc.astype(o_ref.dtype)


def conv1d_pallas(x, weight, *, stride=1, l_tile=1024,
                  compute_dtype=jnp.bfloat16, out_dtype=None):
    """x: (N, C_in, L); weight: (C_out, C_in, K) (PyTorch layout).

    compute_dtype: dtype the MXU contraction runs in (accumulation is always f32).
    out_dtype: output dtype (defaults to x.dtype; bf16 halves writeback on v5e).
    """
    assert stride == 1, "this kernel implements the module default stride=1"
    # TODO(synk): generalize to stride > 1 (strided output column mapping).
    assert x.ndim == 3 and weight.ndim == 3
    N, C_in, L = x.shape
    C_out, C_in_w, K = weight.shape
    assert C_in_w == C_in

    total_pad = same_padding(K, stride)
    pad = total_pad - total_pad // 2                 # what nn.Conv1d gets (both sides)
    # NOTE: for even K this symmetric padding matches the in-file reference; an
    # asymmetric-pad nn.Conv1d cannot be reproduced exactly (review concern 2).
    L_out = (L + 2 * pad - K) // stride + 1

    out_dtype = x.dtype if out_dtype is None else out_dtype
    csize = jnp.dtype(compute_dtype).itemsize
    osize = jnp.dtype(out_dtype).itemsize

    # Largest lane-dense L tile (multiple of 128, <= l_tile) whose per-step VMEM
    # footprint fits the generation-aware budget.  Bigger tiles amortize the
    # ~0.35us/step overhead (v5e/v6e can usually afford 1024; v7x shrinks).
    budget = _vmem_budget_bytes()
    L_t = min(_round_up(l_tile, 128), _round_up(L_out, 128))
    while True:
        num_l = -(-L_out // L_t)
        L_in = num_l * L_t + K - 1                   # padded row length the kernel needs
        est = (2 * C_in * L_in * csize               # resident padded row (worst case 2 bufs)
               + 2 * K * C_out * C_in * csize        # resident weight
               + 2 * C_out * L_t * osize             # double-buffered output tile
               + 2 * C_in * L_t * csize              # live per-tap input slices
               + 2 * C_out * L_t * 4)                # f32 dot results / accumulator
        if est <= budget or L_t <= 128:
            break
        L_t = max(128, _round_up(L_t // 2, 128))
    # TODO(synk): if est still exceeds the budget (very long L / wide C_in), switch the
    # input to memory_space=pl.ANY and manually double-buffer (C_in, L_t + K - 1) halo
    # windows with pltpu.make_async_copy instead of keeping the whole row resident.
    vmem_limit = int(min(budget, max(int(est * 1.25), 32 * _MIB)))

    # Glue in plain JAX: zero-pad length (left conv pad; right conv pad + tile
    # remainder) and cast to compute_dtype; weight -> (K, C_out, C_in).
    # TODO(synk): fold the pad + cast into the kernel (mask the edge tiles' halo
    # in-kernel) to remove this extra input HBM round trip.
    right_pad = L_in - L - pad
    x_pad = jnp.pad(x, ((0, 0), (0, 0), (pad, right_pad))).astype(compute_dtype)
    w_k = jnp.transpose(weight, (2, 0, 1)).astype(compute_dtype)     # (K, C_out, C_in)

    kernel = functools.partial(_conv1d_kernel, K=K, L_t=L_t,
                               single_l_tile=(num_l == 1))

    cost = pl.CostEstimate(
        flops=2 * N * C_out * L_out * K * C_in,
        transcendentals=0,
        bytes_accessed=(N * C_in * L_in * csize
                        + K * C_out * C_in * csize
                        + N * C_out * L_out * osize),
    )

    def _run(resident_kwargs):
        in_specs = [
            # Full padded row per batch, resident across the L-tile axis.
            pl.BlockSpec((1, C_in, L_in), lambda n, l: (n, 0, 0), **resident_kwargs),
            # Per-tap weight slabs, resident across the whole grid.
            pl.BlockSpec((K, C_out, C_in), lambda n, l: (0, 0, 0), **resident_kwargs),
        ]
        return pl.pallas_call(
            kernel,
            # True output length: Pallas masks the ragged final L tile, so no
            # wrapper-side output padding / slicing HBM round trip.
            out_shape=jax.ShapeDtypeStruct((N, C_out, L_out), out_dtype),
            grid_spec=pltpu.PrefetchScalarGridSpec(
                num_scalar_prefetch=0,
                grid=(N, num_l),
                in_specs=in_specs,
                out_specs=pl.BlockSpec((1, C_out, L_t), lambda n, l: (n, 0, l)),
            ),
            compiler_params=pltpu.CompilerParams(
                dimension_semantics=("parallel", "parallel"),
                vmem_limit_bytes=vmem_limit,
            ),
            cost_estimate=cost,
        )(x_pad, w_k)

    if _supports_pipeline_mode():
        try:
            # Row changes only once per n and the weight never changes: single-buffer
            # both (halves the dominant resident VMEM term for v7x's 64 MiB).  If this
            # jax/Mosaic version rejects Buffered(1), fall back to the default pipeline.
            return _run({"pipeline_mode": pl.Buffered(1)})
        except Exception:
            pass
    return _run({})


def _reference_conv1d(x, weight, *, stride=1):
    """Pure-JAX f32 reference (matches nn.Conv1d with the module's padding)."""
    K = weight.shape[-1]
    total_pad = same_padding(K, stride)
    pad = total_pad - total_pad // 2
    return jax.lax.conv_general_dilated(
        x, weight,
        window_strides=(stride,),
        padding=[(pad, pad)],
        dimension_numbers=("NCH", "OIH", "NCH"),
        precision=jax.lax.Precision.HIGHEST,
    )


if __name__ == "__main__":
    # Small shapes consistent with the module: Conv1D(in_channels=4, out_channels=8, kernel_size=3)
    N, C_in, C_out, L, K = 2, 4, 8, 16, 3

    key = jax.random.PRNGKey(0)
    kx, kw = jax.random.split(key)
    x = jax.random.normal(kx, (N, C_in, L), dtype=jnp.float32)
    # Deterministic kaiming-uniform-like init (bound = 1/sqrt(C_in * K)), bias=False.
    bound = 1.0 / (C_in * K) ** 0.5
    weight = jax.random.uniform(kw, (C_out, C_in, K), dtype=jnp.float32,
                                minval=-bound, maxval=bound)

    out = conv1d_pallas(x, weight, stride=1)
    out = jax.block_until_ready(out)

    ref = _reference_conv1d(x, weight, stride=1)
    assert out.shape == ref.shape, (out.shape, ref.shape)
    # bf16 inputs with f32 accumulation -> loosened tolerance vs the f32 reference.
    assert jnp.allclose(out, ref, atol=5e-2, rtol=5e-2), "mismatch vs reference conv"

    print("KERNEL_OK")
</pallas_src>

<mosaic_0001>
module attributes {stable_mosaic.version = 11 : i64} {
  func.func @_conv1d_kernel(%arg0: i32, %arg1: i32, %arg2: memref<1x4x130xbf16, #tpu.memory_space<vmem>>, %arg3: memref<3x8x4xbf16, #tpu.memory_space<vmem>>, %arg4: memref<1x8x128xf32, #tpu.memory_space<vmem>>) attributes {dimension_semantics = [#tpu.dimension_semantics<parallel>, #tpu.dimension_semantics<parallel>], iteration_bounds = array<i64: 2, 1>, scalar_prefetch = 0 : i64, scratch_operands = 0 : i64, tpu.core_type = #tpu.core_type<tc>, window_params = [{pipeline_mode = #tpu.pipeline_mode<synchronous>, transform_indices = @transform_0, window_bounds = array<i64: 1, 4, 130>}, {pipeline_mode = #tpu.pipeline_mode<synchronous>, transform_indices = @transform_1, window_bounds = array<i64: 3, 8, 4>}, {transform_indices = @transform_2, window_bounds = array<i64: 1, 8, 128>}]} {
    %c0 = arith.constant 0 : index
    %c0_0 = arith.constant 0 : index
    %c0_1 = arith.constant 0 : index
    %0 = vector.load %arg2[%c0, %c0_0, %c0_1] : memref<1x4x130xbf16, #tpu.memory_space<vmem>>, vector<1x4x128xbf16>
    %1 = vector.shape_cast %0 : vector<1x4x128xbf16> to vector<4x128xbf16>
    %c0_2 = arith.constant 0 : index
    %c0_3 = arith.constant 0 : index
    %c0_4 = arith.constant 0 : index
    %2 = vector.load %arg3[%c0_2, %c0_3, %c0_4] : memref<3x8x4xbf16, #tpu.memory_space<vmem>>, vector<1x8x4xbf16>
    %3 = vector.shape_cast %2 : vector<1x8x4xbf16> to vector<8x4xbf16>
    %cst = arith.constant dense<0.000000e+00> : vector<8x128xf32>
    %4 = tpu.matmul %3, %1, %cst {dimension_numbers = #tpu.dot_dimension_numbers<[1], [0], [0], [1], [0, 0, 1, 1], [], []>} : vector<8x4xbf16>, vector<4x128xbf16>, vector<8x128xf32> -> vector<8x128xf32>
    %c0_5 = arith.constant 0 : index
    %c0_6 = arith.constant 0 : index
    %c1 = arith.constant 1 : index
    %5 = vector.load %arg2[%c0_5, %c0_6, %c1] : memref<1x4x130xbf16, #tpu.memory_space<vmem>>, vector<1x4x128xbf16>
    %6 = vector.shape_cast %5 : vector<1x4x128xbf16> to vector<4x128xbf16>
    %c1_7 = arith.constant 1 : index
    %c0_8 = arith.constant 0 : index
    %c0_9 = arith.constant 0 : index
    %7 = vector.load %arg3[%c1_7, %c0_8, %c0_9] : memref<3x8x4xbf16, #tpu.memory_space<vmem>>, vector<1x8x4xbf16>
    %8 = vector.shape_cast %7 : vector<1x8x4xbf16> to vector<8x4xbf16>
    %cst_10 = arith.constant dense<0.000000e+00> : vector<8x128xf32>
    %9 = tpu.matmul %8, %6, %cst_10 {dimension_numbers = #tpu.dot_dimension_numbers<[1], [0], [0], [1], [0, 0, 1, 1], [], []>} : vector<8x4xbf16>, vector<4x128xbf16>, vector<8x128xf32> -> vector<8x128xf32>
    %10 = arith.addf %4, %9 : vector<8x128xf32>
    %c0_11 = arith.constant 0 : index
    %c0_12 = arith.constant 0 : index
    %c2 = arith.constant 2 : index
    %11 = vector.load %arg2[%c0_11, %c0_12, %c2] : memref<1x4x130xbf16, #tpu.memory_space<vmem>>, vector<1x4x128xbf16>
    %12 = vector.shape_cast %11 : vector<1x4x128xbf16> to vector<4x128xbf16>
    %c2_13 = arith.constant 2 : index
    %c0_14 = arith.constant 0 : index
    %c0_15 = arith.constant 0 : index
    %13 = vector.load %arg3[%c2_13, %c0_14, %c0_15] : memref<3x8x4xbf16, #tpu.memory_space<vmem>>, vector<1x8x4xbf16>
    %14 = vector.shape_cast %13 : vector<1x8x4xbf16> to vector<8x4xbf16>
    %cst_16 = arith.constant dense<0.000000e+00> : vector<8x128xf32>
    %15 = tpu.matmul %14, %12, %cst_16 {dimension_numbers = #tpu.dot_dimension_numbers<[1], [0], [0], [1], [0, 0, 1, 1], [], []>} : vector<8x4xbf16>, vector<4x128xbf16>, vector<8x128xf32> -> vector<8x128xf32>
    %16 = arith.addf %10, %15 : vector<8x128xf32>
    %c0_17 = arith.constant 0 : index
    %c0_18 = arith.constant 0 : index
    %c0_19 = arith.constant 0 : index
    %17 = vector.load %arg4[%c0_17, %c0_18, %c0_19] : memref<1x8x128xf32, #tpu.memory_space<vmem>>, vector<1x8x128xf32>
    %18 = vector.shape_cast %17 : vector<1x8x128xf32> to vector<8x128xf32>
    %19 = vector.shape_cast %16 : vector<8x128xf32> to vector<1x8x128xf32>
    tpu.vector_store %arg4[%c0_17, %c0_18, %c0_19], %19 {strides = array<i32>} : memref<1x8x128xf32, #tpu.memory_space<vmem>>, vector<1x8x128xf32>,
    return
  }
  func.func @transform_0(%arg0: i32, %arg1: i32) -> (i32, i32, i32) {
    %c0_i32 = arith.constant 0 : i32
    %c0_i32_0 = arith.constant 0 : i32
    %c0_i32_1 = arith.constant 0 : i32
    return %arg0, %c0_i32, %c0_i32_0 : i32, i32, i32
  }
  func.func @transform_1(%arg0: i32, %arg1: i32) -> (i32, i32, i32) {
    %c0_i32 = arith.constant 0 : i32
    %c0_i32_0 = arith.constant 0 : i32
    %c0_i32_1 = arith.constant 0 : i32
    %c0_i32_2 = arith.constant 0 : i32
    return %c0_i32, %c0_i32_0, %c0_i32_1 : i32, i32, i32
  }
  func.func @transform_2(%arg0: i32, %arg1: i32) -> (i32, i32, i32) {
    %c0_i32 = arith.constant 0 : i32
    %c0_i32_0 = arith.constant 0 : i32
    return %arg0, %c0_i32, %arg1 : i32, i32, i32
  }
}

module attributes {stable_mosaic.version = 11 : i64} {
  func.func @_conv1d_kernel(%arg0: i32, %arg1: i32, %arg2: memref<1x4x130xbf16, #tpu.memory_space<vmem>>, %arg3: memref<3x8x4xbf16, #tpu.memory_space<vmem>>, %arg4: memref<1x8x128xf32, #tpu.memory_space<vmem>>) attributes {dimension_semantics = [#tpu.dimension_semantics<parallel>, #tpu.dimension_semantics<parallel>], iteration_bounds = array<i64: 2, 1>, scalar_prefetch = 0 : i64, scratch_operands = 0 : i64, tpu.core_type = #tpu.core_type<tc>, window_params = [{transform_indices = @transform_0, window_bounds = array<i64: 1, 4, 130>}, {pipeline_mode = #tpu.pipeline_mode<synchronous>, transform_indices = @transform_1, window_bounds = array<i64: 3, 8, 4>}, {transform_indices = @transform_2, window_bounds = array<i64: 1, 8, 128>}]} {
    %c0 = arith.constant 0 : index
    %c0_0 = arith.constant 0 : index
    %c0_1 = arith.constant 0 : index
    %0 = vector.load %arg2[%c0, %c0_0, %c0_1] : memref<1x4x130xbf16, #tpu.memory_space<vmem>>, vector<1x4x128xbf16>
    %1 = vector.shape_cast %0 : vector<1x4x128xbf16> to vector<4x128xbf16>
    %c0_2 = arith.constant 0 : index
    %c0_3 = arith.constant 0 : index
    %c0_4 = arith.constant 0 : index
    %2 = vector.load %arg3[%c0_2, %c0_3, %c0_4] : memref<3x8x4xbf16, #tpu.memory_space<vmem>>, vector<1x8x4xbf16>
    %3 = vector.shape_cast %2 : vector<1x8x4xbf16> to vector<8x4xbf16>
    %cst = arith.constant dense<0.000000e+00> : vector<8x128xf32>
    %4 = tpu.matmul %3, %1, %cst {dimension_numbers = #tpu.dot_dimension_numbers<[1], [0], [0], [1], [0, 0, 1, 1], [], []>} : vector<8x4xbf16>, vector<4x128xbf16>, vector<8x128xf32> -> vector<8x128xf32>
    %c0_5 = arith.constant 0 : index
    %c0_6 = arith.constant 0 : index
    %c1 = arith.constant 1 : index
    %5 = vector.load %arg2[%c0_5, %c0_6, %c1] : memref<1x4x130xbf16, #tpu.memory_space<vmem>>, vector<1x4x128xbf16>
    %6 = vector.shape_cast %5 : vector<1x4x128xbf16> to vector<4x128xbf16>
    %c1_7 = arith.constant 1 : index
    %c0_8 = arith.constant 0 : index
    %c0_9 = arith.constant 0 : index
    %7 = vector.load %arg3[%c1_7, %c0_8, %c0_9] : memref<3x8x4xbf16, #tpu.memory_space<vmem>>, vector<1x8x4xbf16>
    %8 = vector.shape_cast %7 : vector<1x8x4xbf16> to vector<8x4xbf16>
    %cst_10 = arith.constant dense<0.000000e+00> : vector<8x128xf32>
    %9 = tpu.matmul %8, %6, %cst_10 {dimension_numbers = #tpu.dot_dimension_numbers<[1], [0], [0], [1], [0, 0, 1, 1], [], []>} : vector<8x4xbf16>, vector<4x128xbf16>, vector<8x128xf32> -> vector<8x128xf32>
    %10 = arith.addf %4, %9 : vector<8x128xf32>
    %c0_11 = arith.constant 0 : index
    %c0_12 = arith.constant 0 : index
    %c2 = arith.constant 2 : index
    %11 = vector.load %arg2[%c0_11, %c0_12, %c2] : memref<1x4x130xbf16, #tpu.memory_space<vmem>>, vector<1x4x128xbf16>
    %12 = vector.shape_cast %11 : vector<1x4x128xbf16> to vector<4x128xbf16>
    %c2_13 = arith.constant 2 : index
    %c0_14 = arith.constant 0 : index
    %c0_15 = arith.constant 0 : index
    %13 = vector.load %arg3[%c2_13, %c0_14, %c0_15] : memref<3x8x4xbf16, #tpu.memory_space<vmem>>, vector<1x8x4xbf16>
    %14 = vector.shape_cast %13 : vector<1x8x4xbf16> to vector<8x4xbf16>
    %cst_16 = arith.constant dense<0.000000e+00> : vector<8x128xf32>
    %15 = tpu.matmul %14, %12, %cst_16 {dimension_numbers = #tpu.dot_dimension_numbers<[1], [0], [0], [1], [0, 0, 1, 1], [], []>} : vector<8x4xbf16>, vector<4x128xbf16>, vector<8x128xf32> -> vector<8x128xf32>
    %16 = arith.addf %10, %15 : vector<8x128xf32>
    %c0_17 = arith.constant 0 : index
    %c0_18 = arith.constant 0 : index
    %c0_19 = arith.constant 0 : index
    %17 = vector.load %arg4[%c0_17, %c0_18, %c0_19] : memref<1x8x128xf32, #tpu.memory_space<vmem>>, vector<1x8x128xf32>
    %18 = vector.shape_cast %17 : vector<1x8x128xf32> to vector<8x128xf32>
    %19 = vector.shape_cast %16 : vector<8x128xf32> to vector<1x8x128xf32>
    tpu.vector_store %arg4[%c0_17, %c0_18, %c0_19], %19 {strides = array<i32>} : memref<1x8x128xf32, #tpu.memory_space<vmem>>, vector<1x8x128xf32>,
    return
  }
  func.func @transform_0(%arg0: i32, %arg1: i32) -> (i32, i32, i32) {
    %c0_i32 = arith.constant 0 : i32
    %c0_i32_0 = arith.constant 0 : i32
    %c0_i32_1 = arith.constant 0 : i32
    return %arg0, %c0_i32, %c0_i32_0 : i32, i32, i32
  }
  func.func @transform_1(%arg0: i32, %arg1: i32) -> (i32, i32, i32) {
    %c0_i32 = arith.constant 0 : i32
    %c0_i32_0 = arith.constant 0 : i32
    %c0_i32_1 = arith.constant 0 : i32
    %c0_i32_2 = arith.constant 0 : i32
    return %c0_i32, %c0_i32_0, %c0_i32_1 : i32, i32, i32
  }
  func.func @transform_2(%arg0: i32, %arg1: i32) -> (i32, i32, i32) {
    %c0_i32 = arith.constant 0 : i32
    %c0_i32_0 = arith.constant 0 : i32
    return %arg0, %c0_i32, %arg1 : i32, i32, i32
  }
}

</mosaic_0001>

<llo_original>
// kernel: tpu_custom_call.1
$region0: #{tpu_custom_call.1}
  #allocation0 [shape = 'u32[]', space=smem, size = 0x4, offset = 0x4, fixed_abs, tag = 'smem constant byte address 0x4 - core index']
  #allocation1 [shape = 'u32[144,128]{1,0:T(1,128)}', space=vmem, size = 0x12000, scoped, tag = 'internal scratch']
  %s0 = inlined_call_operand.vmem [shape: bf16[2,4,130], index: 0, kind: input, shape index: {}]
  %s1 = inlined_call_operand.vmem [shape: bf16[3,8,4], index: 1, kind: input, shape index: {}]
  %s2 = inlined_call_operand.hbm [shape: f32[2,8,16], index: 2, kind: output, shape index: {}]
  %s3 = sld [smem:[#allocation0]]
  $region41: #{tpu_custom_call.1} parent=0
    _
  %s5 = ssub.s32 1, %s3
  %s6 = scalar_select 0, %s5, %s3
  $region1: #{tpu_custom_call.1} parent=0
    #allocation2 [shape = 'u8[8192]{0}', space=vmem, size = 0x2000, scoped, tag = 'output window, operand 0']
    #allocation3 [shape = 's32[2]{0}', space=sflag, size = 0x8, scoped, tag = 'scoped memory for tpu_custom_call.1']
    %7 = vsyncpa [#allocation3], 0
    %s8 = scalar_lea.sflag [#allocation3], 1
    %9 = vsyncpa %s8, 0
    loop: start=0, step=1, limit=4
    $region2: #{tpu_custom_call.1} parent=1 // loop_pre_header
      _
    $region3: #{tpu_custom_call.1} parent=1 // loop_header
      %s11 = sphi 0, %s15
      %p12 = scmp.ge.s32.totalorder %s11, 4
      %s18 = sphi 0, %s30
      %s19 = sphi 0, %s26
      %s20 = sphi 0, %s18
      %s21 = sphi 0, %s19
      %s22 = sphi 0, %s20
      %s23 = sphi 0, %s21
      %s33 = sphi 0, %s35
      %s36 = sphi 0, %s33
      %s37 = sphi 0, %s36
      %s53 = sphi 0, %s37
      %s57 = sphi 0, %s57
      %s59 = sphi 0, %s57
      %s60 = sphi 0, %s59
      %s74 = sphi 0, %s60
      %s82 = sphi 0, %s84
      %s85 = sphi 0, %s82
      %s86 = sphi 0, %s85
      %s102 = sphi 0, %s86
    $region4: #{tpu_custom_call.1} parent=1 // loop_header_branch
      %14 = sbr.rel (%p12) target = $region8
    $region5: #{tpu_custom_call.1} parent=1 // loop_body
      %s16 = ssub.s32 %s11, 1
      %s17 = ssub.s32 %s11, 2
      %s24 = sadd.s32 1, %s19
      %p25 = scmp.ge.s32.totalorder %s24, 1
      %s26 = scalar_select %p25, 0, %s24
      %s27 = sadd.s32 1, %s18
      %s28 = scalar_select %p25, %s27, %s18
      %p29 = scmp.ge.s32.totalorder %s28, 2
      %s30 = scalar_select %p29, 0, %s28
      %s31 = ssub.s32 %s18, %s30
      %p32 = scmp.eq.s32.totalorder %s31, 0
      %s34 = sadd.s32 %s33, 1
      %s35 = scalar_select %p32, %s33, %s34
      %p38 = pneg %p32
      %p39 = scmp.eq.s32.totalorder %s11, 1
      %p40 = por %p38, %p39
      %p41 = scmp.ne.s32.totalorder %s33, %s36
      %p42 = scmp.eq.s32.totalorder %s11, 0
      %p43 = por %p41, %p42
      %p44 = scmp.ne.s32.totalorder %s33, %s36
      %p45 = scmp.eq.s32.totalorder %s16, 1
      %p46 = por %p44, %p45
      %p47 = scmp.ne.s32.totalorder %s36, %s37
      %p48 = scmp.eq.s32.totalorder %s16, 0
      %p49 = por %p47, %p48
      %p50 = scmp.ne.s32.totalorder %s36, %s37
      %p51 = scmp.eq.s32.totalorder %s17, 1
      %p52 = por %p50, %p51
      %p54 = scmp.ne.s32.totalorder %s37, %s53
      %p55 = scmp.eq.s32.totalorder %s17, 0
      %p56 = por %p54, %p55
      %s58 = sadd.s32 %s57, 1
      %p61 = scmp.eq.s32.totalorder %s11, 1
      %p62 = scmp.ne.s32.totalorder %s57, %s59
      %p63 = scmp.eq.s32.totalorder %s11, 0
      %p64 = por %p62, %p63
      %p65 = scmp.ne.s32.totalorder %s57, %s59
      %p66 = scmp.eq.s32.totalorder %s16, 1
      %p67 = por %p65, %p66
      %p68 = scmp.ne.s32.totalorder %s59, %s60
      %p69 = scmp.eq.s32.totalorder %s16, 0
      %p70 = por %p68, %p69
      %p71 = scmp.ne.s32.totalorder %s59, %s60
      %p72 = scmp.eq.s32.totalorder %s17, 1
      %p73 = por %p71, %p72
      %p75 = scmp.ne.s32.totalorder %s60, %s74
      %p76 = scmp.eq.s32.totalorder %s17, 0
      %p77 = por %p75, %p76
      %s78 = ssub.s32 %s18, %s30
      %s79 = ssub.s32 %s19, %s26
      %s80 = sor.u32 %s78, %s79
      %p81 = scmp.eq.s32.totalorder %s80, 0
      %s83 = sadd.s32 %s82, 1
      %s84 = scalar_select %p81, %s82, %s83
      %p87 = pneg %p81
      %p88 = scmp.eq.s32.totalorder %s11, 1
      %p89 = por %p87, %p88
      %p90 = scmp.ne.s32.totalorder %s82, %s85
      %p91 = scmp.eq.s32.totalorder %s11, 0
      %p92 = por %p90, %p91
      %p93 = scmp.ne.s32.totalorder %s82, %s85
      %p94 = scmp.eq.s32.totalorder %s16, 1
      %p95 = por %p93, %p94
      %p96 = scmp.ne.s32.totalorder %s85, %s86
      %p97 = scmp.eq.s32.totalorder %s16, 0
      %p98 = por %p96, %p97
      %p99 = scmp.ne.s32.totalorder %s85, %s86
      %p100 = scmp.eq.s32.totalorder %s17, 1
      %p101 = por %p99, %p100
      %p103 = scmp.ne.s32.totalorder %s86, %s102
      %p104 = scmp.eq.s32.totalorder %s17, 0
      %p105 = por %p103, %p104
      %p106 = scmp.le.s32.totalorder 1, %s11
      %p107 = scmp.lt.s32.totalorder %s11, 3
      %p108 = pnand %p106, %p107
      %p109 = pneg %p108
      // Predicated region
      $region9: #{tpu_custom_call.1} parent=5 // pred_check
        _
      $region10: #{tpu_custom_call.1} parent=5 // pred_check_branch
        %111 = sbr.rel (%p108) target = $region12
      $region11: #{tpu_custom_call.1} parent=5 // pred_region
        %s112 = ssub.s32 %s11, 1
        // Predicated region
        $region13: #{tpu_custom_call.1} parent=11 // pred_check
          %p113 = pneg %p49
        $region14: #{tpu_custom_call.1} parent=11 // pred_check_branch
          %115 = sbr.rel (%p113) target = $region16
        $region15: #{tpu_custom_call.1} parent=11 // pred_region
          %p116 = scmp.lt.s32.totalorder %s20, 1
          %s117 = scalar_select %p116, %s20, 1
          %s118 = smul.addr %s117, 2
          %s119 = smul.addr %s118, 2
          %s120 = scalar_lea.vmem %s0, %s119
        $region16: #{tpu_custom_call.1} parent=11 // pred_fallthru
          _
        // Predicated region
        $region17: #{tpu_custom_call.1} parent=11 // pred_check
          %p121 = pneg %p70
        $region18: #{tpu_custom_call.1} parent=11 // pred_check_branch
          %123 = sbr.rel (%p121) target = $region20
        $region19: #{tpu_custom_call.1} parent=11 // pred_region
          _
        $region20: #{tpu_custom_call.1} parent=11 // pred_fallthru
          _
      $region12: #{tpu_custom_call.1} parent=5 // pred_fallthru
        _
      %p124 = scmp.lt.s32.totalorder %s11, 2
      // Predicated region
      $region21: #{tpu_custom_call.1} parent=5 // pred_check
        %p125 = pneg %p124
      $region22: #{tpu_custom_call.1} parent=5 // pred_check_branch
        %127 = sbr.rel (%p125) target = $region24
      $region23: #{tpu_custom_call.1} parent=5 // pred_region
        _
      $region24: #{tpu_custom_call.1} parent=5 // pred_fallthru
        _
      %p128 = scmp.le.s32.totalorder 1, %s11
      %p129 = scmp.lt.s32.totalorder %s11, 3
      %p130 = pnand %p128, %p129
      %p131 = pneg %p130
      // Predicated region
      $region25: #{tpu_custom_call.1} parent=5 // pred_check
        _
      $region26: #{tpu_custom_call.1} parent=5 // pred_check_branch
        %133 = sbr.rel (%p130) target = $region28
      $region27: #{tpu_custom_call.1} parent=5 // pred_region
        %s134 = ssub.s32 %s11, 1
        %p135 = scmp.lt.s32.totalorder %s20, 1
        %s136 = scalar_select %p135, %s20, 1
        %s137 = smul.addr %s136, 2
        %s138 = smul.addr %s137, 2
        %s139 = scalar_lea.vmem %s0, %s138
        %p140 = pneg %p49
        %p141 = pneg %p46
        %p142 = pneg %p70
        %p143 = pneg %p67
        %p144 = pneg %p98
        %p145 = pneg %p95
        %s146 = sand.u32 %s85, 1
        %s147 = scalar_lea.sflag [#allocation3], %s146
        %s148 = sand.u32 %s85, 1
        %s149 = smul.addr %s148, 8
        %s150 = scalar_lea.vmem [#allocation2], %s149
        %p151 = scmp.lt.s32.totalorder %s20, 1
        %s152 = scalar_select %p151, %s20, 1
        %s153 = smul.addr %s152, 2
        %s154 = smul.addr %s153, 2
        %s155 = scalar_lea.vmem %s0, %s154
        %v157 = vld [vmem:[%s155] sm:$0x3]
        %v158 = vld [vmem:[%s1] sm:$0xf]
        %v159 = vld [vmem:[%s155] sm:$0xf]
        %s160 = scalar_lea.vmem %s1, 4
        %v161 = vld [vmem:[%s160] sm:$0xf]
        %v164 = vunpack.c.l.s4 1983009808
        %v165 = vunpack.c.0.s8 %v164
        %v166 = vlaneseq
        %v167 = vshrl.u32 %v166, 7
        %v168 = vsub.s32 %v165, %v167
        %v169 = vrot.slane %v159, %v168
        %v170 = vcombine.high %v169, %v169
        %171 = vrot.lane.b32.xlu0 %v169, 127
        %v172 = vpop.permute.xlu0 %171
        %173 = vrot.lane.b32.xlu0 %v170, 127
        %v174 = vpop.permute.xlu0 %173
        %vm175 = vcmask 1039360
        %v176 = vsel %vm175, %v172, %v174
        %vm177 = vcmask 31744
        %v179 = vsel %vm177, %v161, 0
        %vm181 = vcmask 1041408
        %v183 = vsel %vm181, %v176, 0
        %185 = vmatprep.subr.bf16.mxu0 0
        %186 = vmatpush1.bf16.msra.mxu0 %v183
        %187 = vmatprep.subr.bf16.mxu0 0
        %188 = vmatpush1.bf16.msra.mxu0 0
        %189 = vmatprep.subr.bf16.mxu0 0
        %190 = vmatpush1.bf16.msra.mxu0 0
        %191 = vmatprep.subr.bf16.mxu0 0
        %192 = vmatpush1.bf16.msra.mxu0 0
        %193 = vmatprep.subr.bf16.mxu0 0
        %194 = vmatpush1.bf16.msra.mxu0 0
        %195 = vmatprep.subr.bf16.mxu0 0
        %196 = vmatpush1.bf16.msra.mxu0 0
        %197 = vmatprep.subr.bf16.mxu0 0
        %198 = vmatpush1.bf16.msra.mxu0 0
        %199 = vmatprep.subr.bf16.mxu0 0
        %200 = vmatpush1.bf16.msra.mxu0 0
        %201 = vmatprep.subr.bf16.mxu0 0
        %202 = vmatpush1.bf16.msra.mxu0 0
        %203 = vmatprep.subr.bf16.mxu0 0
        %204 = vmatpush1.bf16.msra.mxu0 0
        %205 = vmatprep.subr.bf16.mxu0 0
        %206 = vmatpush1.bf16.msra.mxu0 0
        %207 = vmatprep.subr.bf16.mxu0 0
        %208 = vmatpush1.bf16.msra.mxu0 0
        %209 = vmatprep.subr.bf16.mxu0 0
        %210 = vmatpush1.bf16.msra.mxu0 0
        %211 = vmatprep.subr.bf16.mxu0 0
        %212 = vmatpush1.bf16.msra.mxu0 0
        %213 = vmatprep.subr.bf16.mxu0 0
        %214 = vmatpush1.bf16.msra.mxu0 0
        %215 = vmatprep.subr.bf16.mxu0 0
        %216 = vmatpush1.bf16.msra.mxu0 0
        %217 = vmatprep.mubr.bf16.mxu0 0
        %218 = vmatmul.mubr.bf16.gmra.mrb[0].mxu0 %v179
        %v219 = vpop.f32.mrb[0].mxu0
        %v220 = vadd.f32 0.0, %v219
        %v221 = vpop.f32.mrb[0].mxu0
        %v222 = vpop.f32.mrb[0].mxu0
        %v223 = vpop.f32.mrb[0].mxu0
        %224 = vdwg.mxu0
        %v226 = vsel %vm177, %v158, 0
        %v229 = vsel %vm181, %v157, 0
        %231 = vmatprep.subr.bf16.mxu0 0
        %232 = vmatpush1.bf16.msra.mxu0 %v229
        %233 = vmatprep.subr.bf16.mxu0 0
        %234 = vmatpush1.bf16.msra.mxu0 0
        %235 = vmatprep.subr.bf16.mxu0 0
        %236 = vmatpush1.bf16.msra.mxu0 0
        %237 = vmatprep.subr.bf16.mxu0 0
        %238 = vmatpush1.bf16.msra.mxu0 0
        %239 = vmatprep.subr.bf16.mxu0 0
        %240 = vmatpush1.bf16.msra.mxu0 0
        %241 = vmatprep.subr.bf16.mxu0 0
        %242 = vmatpush1.bf16.msra.mxu0 0
        %243 = vmatprep.subr.bf16.mxu0 0
        %244 = vmatpush1.bf16.msra.mxu0 0
        %245 = vmatprep.subr.bf16.mxu0 0
        %246 = vmatpush1.bf16.msra.mxu0 0
        %247 = vmatprep.subr.bf16.mxu0 0
        %248 = vmatpush1.bf16.msra.mxu0 0
        %249 = vmatprep.subr.bf16.mxu0 0
        %250 = vmatpush1.bf16.msra.mxu0 0
        %251 = vmatprep.subr.bf16.mxu0 0
        %252 = vmatpush1.bf16.msra.mxu0 0
        %253 = vmatprep.subr.bf16.mxu0 0
        %254 = vmatpush1.bf16.msra.mxu0 0
        %255 = vmatprep.subr.bf16.mxu0 0
        %256 = vmatpush1.bf16.msra.mxu0 0
        %257 = vmatprep.subr.bf16.mxu0 0
        %258 = vmatpush1.bf16.msra.mxu0 0
        %259 = vmatprep.subr.bf16.mxu0 0
        %260 = vmatpush1.bf16.msra.mxu0 0
        %261 = vmatprep.subr.bf16.mxu0 0
        %262 = vmatpush1.bf16.msra.mxu0 0
        %263 = vmatprep.mubr.bf16.mxu0 0
        %264 = vmatmul.mubr.bf16.gmra.mrb[0].mxu0 %v226
        %v265 = vpop.f32.mrb[0].mxu0
        %v266 = vadd.f32 %v220, %v265
        %v267 = vpop.f32.mrb[0].mxu0
        %v268 = vpop.f32.mrb[0].mxu0
        %v269 = vpop.f32.mrb[0].mxu0
        %270 = vdwg.mxu0
        %v271 = vld [vmem:[%s155] sm:$0xf]
        %s272 = scalar_lea.vmem %s1, 8
        %v273 = vld [vmem:[%s272] sm:$0xf]
        %v276 = vunpack.c.l.s4 1983009808
        %v277 = vunpack.c.0.s8 %v276
        %v278 = vlaneseq
        %v279 = vshrl.u32 %v278, 7
        %v280 = vsub.s32 %v277, %v279
        %v281 = vrot.slane %v271, %v280
        %v282 = vcombine.high %v281, %v281
        %283 = vrot.lane.b32.xlu0 %v281, 126
        %v284 = vpop.permute.xlu0 %283
        %285 = vrot.lane.b32.xlu0 %v282, 126
        %v286 = vpop.permute.xlu0 %285
        %vm287 = vcmask 1031168
        %v288 = vsel %vm287, %v284, %v286
        %v290 = vsel %vm177, %v273, 0
        %v293 = vsel %vm181, %v288, 0
        %295 = vmatprep.subr.bf16.mxu0 0
        %296 = vmatpush1.bf16.msra.mxu0 %v293
        %297 = vmatprep.subr.bf16.mxu0 0
        %298 = vmatpush1.bf16.msra.mxu0 0
        %299 = vmatprep.subr.bf16.mxu0 0
        %300 = vmatpush1.bf16.msra.mxu0 0
        %301 = vmatprep.subr.bf16.mxu0 0
        %302 = vmatpush1.bf16.msra.mxu0 0
        %303 = vmatprep.subr.bf16.mxu0 0
        %304 = vmatpush1.bf16.msra.mxu0 0
        %305 = vmatprep.subr.bf16.mxu0 0
        %306 = vmatpush1.bf16.msra.mxu0 0
        %307 = vmatprep.subr.bf16.mxu0 0
        %308 = vmatpush1.bf16.msra.mxu0 0
        %309 = vmatprep.subr.bf16.mxu0 0
        %310 = vmatpush1.bf16.msra.mxu0 0
        %311 = vmatprep.subr.bf16.mxu0 0
        %312 = vmatpush1.bf16.msra.mxu0 0
        %313 = vmatprep.subr.bf16.mxu0 0
        %314 = vmatpush1.bf16.msra.mxu0 0
        %315 = vmatprep.subr.bf16.mxu0 0
        %316 = vmatpush1.bf16.msra.mxu0 0
        %317 = vmatprep.subr.bf16.mxu0 0
        %318 = vmatpush1.bf16.msra.mxu0 0
        %319 = vmatprep.subr.bf16.mxu0 0
        %320 = vmatpush1.bf16.msra.mxu0 0
        %321 = vmatprep.subr.bf16.mxu0 0
        %322 = vmatpush1.bf16.msra.mxu0 0
        %323 = vmatprep.subr.bf16.mxu0 0
        %324 = vmatpush1.bf16.msra.mxu0 0
        %325 = vmatprep.subr.bf16.mxu0 0
        %326 = vmatpush1.bf16.msra.mxu0 0
        %327 = vmatprep.mubr.bf16.mxu0 0
        %328 = vmatmul.mubr.bf16.gmra.mrb[0].mxu0 %v290
        %v329 = vpop.f32.mrb[0].mxu0
        %v330 = vadd.f32 0.0, %v329
        %v331 = vpop.f32.mrb[0].mxu0
        %v332 = vpop.f32.mrb[0].mxu0
        %v333 = vpop.f32.mrb[0].mxu0
        %334 = vdwg.mxu0
        %v335 = vadd.f32 %v266, %v330
        %336 = vst [vmem:[%s150] sm:$0xff] %v335
        %s337 = sand.u32 %s85, 1
        %s338 = scalar_lea.sflag [#allocation3], %s337
        %s339 = sand.u32 %s85, 1
        %s340 = smul.addr %s339, 8
        %s341 = scalar_lea.vmem [#allocation2], %s340
        // Predicated region
        $region29: #{tpu_custom_call.1} parent=27 // pred_check
          %p342 = pneg %p95
        $region30: #{tpu_custom_call.1} parent=27 // pred_check_branch
          %344 = sbr.rel (%p342) target = $region32
        $region31: #{tpu_custom_call.1} parent=27 // pred_region
          %s346 = ssub.s32 128, 128
          %347 = vsyncadd %s338, %s346
          %s348 = sadd.s32 %s21, %s20
          %s349 = smul.addr %s348, 128
          %s350 = scalar_lea.hbm %s2, %s349
          %s352 = sshll.u32 %s341, 4
          %s353 = int_to_ptr.vmem [resolvable:$true] %s352
          %355 = dma.vmem_to_hbm [thread:$0]  %s353, 128, %s350, %s338
        $region32: #{tpu_custom_call.1} parent=27 // pred_fallthru
          _
      $region28: #{tpu_custom_call.1} parent=5 // pred_fallthru
        _
      %p356 = scmp.le.s32.totalorder 2, %s11
      // Predicated region
      $region33: #{tpu_custom_call.1} parent=5 // pred_check
        %p357 = pneg %p356
      $region34: #{tpu_custom_call.1} parent=5 // pred_check_branch
        %359 = sbr.rel (%p357) target = $region36
      $region35: #{tpu_custom_call.1} parent=5 // pred_region
        %s360 = ssub.s32 %s11, 2
        // Predicated region
        $region37: #{tpu_custom_call.1} parent=35 // pred_check
          %p361 = pneg %p101
        $region38: #{tpu_custom_call.1} parent=35 // pred_check_branch
          %363 = sbr.rel (%p361) target = $region40
        $region39: #{tpu_custom_call.1} parent=35 // pred_region
          %s364 = sand.u32 %s86, 1
          %s365 = scalar_lea.sflag [#allocation3], %s364
          %s366 = sand.u32 %s86, 1
          %s367 = smul.addr %s366, 8
          %s368 = scalar_lea.vmem [#allocation2], %s367
          %369 = dma.done %s365, 128
        $region40: #{tpu_custom_call.1} parent=35 // pred_fallthru
          _
      $region36: #{tpu_custom_call.1} parent=5 // pred_fallthru
        _
    $region6: #{tpu_custom_call.1} parent=1 // loop_footer
      %s15 = sadd.s32 1, %s11
    $region7: #{tpu_custom_call.1} parent=1 // loop_footer_branch
      %10 = sbr.rel target = $region3
    $region8: #{tpu_custom_call.1} parent=1 // loop_exit
      _
    %370 = vsyncpa [#allocation3], 1
    %s371 = scalar_lea.sflag [#allocation3], 1
    %372 = vsyncpa %s371, 1

// kernel: tpu_custom_call.1
$region0: #{tpu_custom_call.1}
  #allocation0 [shape = 'u32[]', space=smem, size = 0x4, offset = 0x4, fixed_abs, tag = 'smem constant byte address 0x4 - core index']
  #allocation1 [shape = 'u32[144,128]{1,0:T(1,128)}', space=vmem, size = 0x12000, scoped, tag = 'internal scratch']
  %s0 = inlined_call_operand.vmem [shape: bf16[2,4,130], index: 0, kind: input, shape index: {}]
  %s1 = inlined_call_operand.vmem [shape: bf16[3,8,4], index: 1, kind: input, shape index: {}]
  %s2 = inlined_call_operand.hbm [shape: f32[2,8,16], index: 2, kind: output, shape index: {}]
  %s3 = sld [smem:[#allocation0]]
  $region41: #{tpu_custom_call.1} parent=0
    _
  %s5 = ssub.s32 1, %s3
  %s6 = scalar_select 0, %s5, %s3
  $region1: #{tpu_custom_call.1} parent=0
    #allocation2 [shape = 'u8[8192]{0}', space=vmem, size = 0x2000, scoped, tag = 'output window, operand 0']
    #allocation3 [shape = 's32[2]{0}', space=sflag, size = 0x8, scoped, tag = 'scoped memory for tpu_custom_call.1']
    %7 = vsyncpa [#allocation3], 0
    %s8 = scalar_lea.sflag [#allocation3], 1
    %9 = vsyncpa %s8, 0
    loop: start=0, step=1, limit=4
    $region2: #{tpu_custom_call.1} parent=1 // loop_pre_header
      _
    $region3: #{tpu_custom_call.1} parent=1 // loop_header
      %s11 = sphi 0, %s15
      %p12 = scmp.ge.s32.totalorder %s11, 4
      %s18 = sphi 0, %s30
      %s19 = sphi 0, %s26
      %s20 = sphi 0, %s18
      %s21 = sphi 0, %s19
      %s22 = sphi 0, %s20
      %s23 = sphi 0, %s21
      %s33 = sphi 0, %s35
      %s36 = sphi 0, %s33
      %s37 = sphi 0, %s36
      %s53 = sphi 0, %s37
      %s57 = sphi 0, %s57
      %s59 = sphi 0, %s57
      %s60 = sphi 0, %s59
      %s74 = sphi 0, %s60
      %s82 = sphi 0, %s84
      %s85 = sphi 0, %s82
      %s86 = sphi 0, %s85
      %s102 = sphi 0, %s86
    $region4: #{tpu_custom_call.1} parent=1 // loop_header_branch
      %14 = sbr.rel (%p12) target = $region8
    $region5: #{tpu_custom_call.1} parent=1 // loop_body
      %s16 = ssub.s32 %s11, 1
      %s17 = ssub.s32 %s11, 2
      %s24 = sadd.s32 1, %s19
      %p25 = scmp.ge.s32.totalorder %s24, 1
      %s26 = scalar_select %p25, 0, %s24
      %s27 = sadd.s32 1, %s18
      %s28 = scalar_select %p25, %s27, %s18
      %p29 = scmp.ge.s32.totalorder %s28, 2
      %s30 = scalar_select %p29, 0, %s28
      %s31 = ssub.s32 %s18, %s30
      %p32 = scmp.eq.s32.totalorder %s31, 0
      %s34 = sadd.s32 %s33, 1
      %s35 = scalar_select %p32, %s33, %s34
      %p38 = pneg %p32
      %p39 = scmp.eq.s32.totalorder %s11, 1
      %p40 = por %p38, %p39
      %p41 = scmp.ne.s32.totalorder %s33, %s36
      %p42 = scmp.eq.s32.totalorder %s11, 0
      %p43 = por %p41, %p42
      %p44 = scmp.ne.s32.totalorder %s33, %s36
      %p45 = scmp.eq.s32.totalorder %s16, 1
      %p46 = por %p44, %p45
      %p47 = scmp.ne.s32.totalorder %s36, %s37
      %p48 = scmp.eq.s32.totalorder %s16, 0
      %p49 = por %p47, %p48
      %p50 = scmp.ne.s32.totalorder %s36, %s37
      %p51 = scmp.eq.s32.totalorder %s17, 1
      %p52 = por %p50, %p51
      %p54 = scmp.ne.s32.totalorder %s37, %s53
      %p55 = scmp.eq.s32.totalorder %s17, 0
      %p56 = por %p54, %p55
      %s58 = sadd.s32 %s57, 1
      %p61 = scmp.eq.s32.totalorder %s11, 1
      %p62 = scmp.ne.s32.totalorder %s57, %s59
      %p63 = scmp.eq.s32.totalorder %s11, 0
      %p64 = por %p62, %p63
      %p65 = scmp.ne.s32.totalorder %s57, %s59
      %p66 = scmp.eq.s32.totalorder %s16, 1
      %p67 = por %p65, %p66
      %p68 = scmp.ne.s32.totalorder %s59, %s60
      %p69 = scmp.eq.s32.totalorder %s16, 0
      %p70 = por %p68, %p69
      %p71 = scmp.ne.s32.totalorder %s59, %s60
      %p72 = scmp.eq.s32.totalorder %s17, 1
      %p73 = por %p71, %p72
      %p75 = scmp.ne.s32.totalorder %s60, %s74
      %p76 = scmp.eq.s32.totalorder %s17, 0
      %p77 = por %p75, %p76
      %s78 = ssub.s32 %s18, %s30
      %s79 = ssub.s32 %s19, %s26
      %s80 = sor.u32 %s78, %s79
      %p81 = scmp.eq.s32.totalorder %s80, 0
      %s83 = sadd.s32 %s82, 1
      %s84 = scalar_select %p81, %s82, %s83
      %p87 = pneg %p81
      %p88 = scmp.eq.s32.totalorder %s11, 1
      %p89 = por %p87, %p88
      %p90 = scmp.ne.s32.totalorder %s82, %s85
      %p91 = scmp.eq.s32.totalorder %s11, 0
      %p92 = por %p90, %p91
      %p93 = scmp.ne.s32.totalorder %s82, %s85
      %p94 = scmp.eq.s32.totalorder %s16, 1
      %p95 = por %p93, %p94
      %p96 = scmp.ne.s32.totalorder %s85, %s86
      %p97 = scmp.eq.s32.totalorder %s16, 0
      %p98 = por %p96, %p97
      %p99 = scmp.ne.s32.totalorder %s85, %s86
      %p100 = scmp.eq.s32.totalorder %s17, 1
      %p101 = por %p99, %p100
      %p103 = scmp.ne.s32.totalorder %s86, %s102
      %p104 = scmp.eq.s32.totalorder %s17, 0
      %p105 = por %p103, %p104
      %p106 = scmp.le.s32.totalorder 1, %s11
      %p107 = scmp.lt.s32.totalorder %s11, 3
      %p108 = pnand %p106, %p107
      %p109 = pneg %p108
      // Predicated region
      $region9: #{tpu_custom_call.1} parent=5 // pred_check
        _
      $region10: #{tpu_custom_call.1} parent=5 // pred_check_branch
        %111 = sbr.rel (%p108) target = $region12
      $region11: #{tpu_custom_call.1} parent=5 // pred_region
        %s112 = ssub.s32 %s11, 1
        // Predicated region
        $region13: #{tpu_custom_call.1} parent=11 // pred_check
          %p113 = pneg %p70
        $region14: #{tpu_custom_call.1} parent=11 // pred_check_branch
          %115 = sbr.rel (%p113) target = $region16
        $region15: #{tpu_custom_call.1} parent=11 // pred_region
          _
        $region16: #{tpu_custom_call.1} parent=11 // pred_fallthru
          _
      $region12: #{tpu_custom_call.1} parent=5 // pred_fallthru
        _
      %p116 = scmp.lt.s32.totalorder %s11, 2
      // Predicated region
      $region17: #{tpu_custom_call.1} parent=5 // pred_check
        %p117 = pneg %p116
      $region18: #{tpu_custom_call.1} parent=5 // pred_check_branch
        %119 = sbr.rel (%p117) target = $region20
      $region19: #{tpu_custom_call.1} parent=5 // pred_region
        // Predicated region
        $region21: #{tpu_custom_call.1} parent=19 // pred_check
          %p120 = pneg %p43
        $region22: #{tpu_custom_call.1} parent=19 // pred_check_branch
          %122 = sbr.rel (%p120) target = $region24
        $region23: #{tpu_custom_call.1} parent=19 // pred_region
          %p123 = scmp.lt.s32.totalorder %s18, 1
          %s124 = scalar_select %p123, %s18, 1
          %s125 = smul.addr %s124, 2
          %s126 = smul.addr %s125, 2
          %s127 = scalar_lea.vmem %s0, %s126
        $region24: #{tpu_custom_call.1} parent=19 // pred_fallthru
          _
      $region20: #{tpu_custom_call.1} parent=5 // pred_fallthru
        _
      %p128 = scmp.le.s32.totalorder 1, %s11
      %p129 = scmp.lt.s32.totalorder %s11, 3
      %p130 = pnand %p128, %p129
      %p131 = pneg %p130
      // Predicated region
      $region25: #{tpu_custom_call.1} parent=5 // pred_check
        _
      $region26: #{tpu_custom_call.1} parent=5 // pred_check_branch
        %133 = sbr.rel (%p130) target = $region28
      $region27: #{tpu_custom_call.1} parent=5 // pred_region
        %s134 = ssub.s32 %s11, 1
        %p135 = scmp.lt.s32.totalorder %s20, 1
        %s136 = scalar_select %p135, %s20, 1
        %s137 = smul.addr %s136, 2
        %s138 = smul.addr %s137, 2
        %s139 = scalar_lea.vmem %s0, %s138
        %p140 = pneg %p49
        %p141 = pneg %p46
        %p142 = pneg %p70
        %p143 = pneg %p67
        %p144 = pneg %p98
        %p145 = pneg %p95
        %s146 = sand.u32 %s85, 1
        %s147 = scalar_lea.sflag [#allocation3], %s146
        %s148 = sand.u32 %s85, 1
        %s149 = smul.addr %s148, 8
        %s150 = scalar_lea.vmem [#allocation2], %s149
        %p151 = scmp.lt.s32.totalorder %s20, 1
        %s152 = scalar_select %p151, %s20, 1
        %s153 = smul.addr %s152, 2
        %s154 = smul.addr %s153, 2
        %s155 = scalar_lea.vmem %s0, %s154
        %v157 = vld [vmem:[%s155] sm:$0x3]
        %v158 = vld [vmem:[%s1] sm:$0xf]
        %v159 = vld [vmem:[%s155] sm:$0xf]
        %s160 = scalar_lea.vmem %s1, 4
        %v161 = vld [vmem:[%s160] sm:$0xf]
        %v164 = vunpack.c.l.s4 1983009808
        %v165 = vunpack.c.0.s8 %v164
        %v166 = vlaneseq
        %v167 = vshrl.u32 %v166, 7
        %v168 = vsub.s32 %v165, %v167
        %v169 = vrot.slane %v159, %v168
        %v170 = vcombine.high %v169, %v169
        %171 = vrot.lane.b32.xlu0 %v169, 127
        %v172 = vpop.permute.xlu0 %171
        %173 = vrot.lane.b32.xlu0 %v170, 127
        %v174 = vpop.permute.xlu0 %173
        %vm175 = vcmask 1039360
        %v176 = vsel %vm175, %v172, %v174
        %vm177 = vcmask 31744
        %v179 = vsel %vm177, %v161, 0
        %vm181 = vcmask 1041408
        %v183 = vsel %vm181, %v176, 0
        %185 = vmatprep.subr.bf16.mxu0 0
        %186 = vmatpush1.bf16.msra.mxu0 %v183
        %187 = vmatprep.subr.bf16.mxu0 0
        %188 = vmatpush1.bf16.msra.mxu0 0
        %189 = vmatprep.subr.bf16.mxu0 0
        %190 = vmatpush1.bf16.msra.mxu0 0
        %191 = vmatprep.subr.bf16.mxu0 0
        %192 = vmatpush1.bf16.msra.mxu0 0
        %193 = vmatprep.subr.bf16.mxu0 0
        %194 = vmatpush1.bf16.msra.mxu0 0
        %195 = vmatprep.subr.bf16.mxu0 0
        %196 = vmatpush1.bf16.msra.mxu0 0
        %197 = vmatprep.subr.bf16.mxu0 0
        %198 = vmatpush1.bf16.msra.mxu0 0
        %199 = vmatprep.subr.bf16.mxu0 0
        %200 = vmatpush1.bf16.msra.mxu0 0
        %201 = vmatprep.subr.bf16.mxu0 0
        %202 = vmatpush1.bf16.msra.mxu0 0
        %203 = vmatprep.subr.bf16.mxu0 0
        %204 = vmatpush1.bf16.msra.mxu0 0
        %205 = vmatprep.subr.bf16.mxu0 0
        %206 = vmatpush1.bf16.msra.mxu0 0
        %207 = vmatprep.subr.bf16.mxu0 0
        %208 = vmatpush1.bf16.msra.mxu0 0
        %209 = vmatprep.subr.bf16.mxu0 0
        %210 = vmatpush1.bf16.msra.mxu0 0
        %211 = vmatprep.subr.bf16.mxu0 0
        %212 = vmatpush1.bf16.msra.mxu0 0
        %213 = vmatprep.subr.bf16.mxu0 0
        %214 = vmatpush1.bf16.msra.mxu0 0
        %215 = vmatprep.subr.bf16.mxu0 0
        %216 = vmatpush1.bf16.msra.mxu0 0
        %217 = vmatprep.mubr.bf16.mxu0 0
        %218 = vmatmul.mubr.bf16.gmra.mrb[0].mxu0 %v179
        %v219 = vpop.f32.mrb[0].mxu0
        %v220 = vadd.f32 0.0, %v219
        %v221 = vpop.f32.mrb[0].mxu0
        %v222 = vpop.f32.mrb[0].mxu0
        %v223 = vpop.f32.mrb[0].mxu0
        %224 = vdwg.mxu0
        %v226 = vsel %vm177, %v158, 0
        %v229 = vsel %vm181, %v157, 0
        %231 = vmatprep.subr.bf16.mxu0 0
        %232 = vmatpush1.bf16.msra.mxu0 %v229
        %233 = vmatprep.subr.bf16.mxu0 0
        %234 = vmatpush1.bf16.msra.mxu0 0
        %235 = vmatprep.subr.bf16.mxu0 0
        %236 = vmatpush1.bf16.msra.mxu0 0
        %237 = vmatprep.subr.bf16.mxu0 0
        %238 = vmatpush1.bf16.msra.mxu0 0
        %239 = vmatprep.subr.bf16.mxu0 0
        %240 = vmatpush1.bf16.msra.mxu0 0
        %241 = vmatprep.subr.bf16.mxu0 0
        %242 = vmatpush1.bf16.msra.mxu0 0
        %243 = vmatprep.subr.bf16.mxu0 0
        %244 = vmatpush1.bf16.msra.mxu0 0
        %245 = vmatprep.subr.bf16.mxu0 0
        %246 = vmatpush1.bf16.msra.mxu0 0
        %247 = vmatprep.subr.bf16.mxu0 0
        %248 = vmatpush1.bf16.msra.mxu0 0
        %249 = vmatprep.subr.bf16.mxu0 0
        %250 = vmatpush1.bf16.msra.mxu0 0
        %251 = vmatprep.subr.bf16.mxu0 0
        %252 = vmatpush1.bf16.msra.mxu0 0
        %253 = vmatprep.subr.bf16.mxu0 0
        %254 = vmatpush1.bf16.msra.mxu0 0
        %255 = vmatprep.subr.bf16.mxu0 0
        %256 = vmatpush1.bf16.msra.mxu0 0
        %257 = vmatprep.subr.bf16.mxu0 0
        %258 = vmatpush1.bf16.msra.mxu0 0
        %259 = vmatprep.subr.bf16.mxu0 0
        %260 = vmatpush1.bf16.msra.mxu0 0
        %261 = vmatprep.subr.bf16.mxu0 0
        %262 = vmatpush1.bf16.msra.mxu0 0
        %263 = vmatprep.mubr.bf16.mxu0 0
        %264 = vmatmul.mubr.bf16.gmra.mrb[0].mxu0 %v226
        %v265 = vpop.f32.mrb[0].mxu0
        %v266 = vadd.f32 %v220, %v265
        %v267 = vpop.f32.mrb[0].mxu0
        %v268 = vpop.f32.mrb[0].mxu0
        %v269 = vpop.f32.mrb[0].mxu0
        %270 = vdwg.mxu0
        %v271 = vld [vmem:[%s155] sm:$0xf]
        %s272 = scalar_lea.vmem %s1, 8
        %v273 = vld [vmem:[%s272] sm:$0xf]
        %v276 = vunpack.c.l.s4 1983009808
        %v277 = vunpack.c.0.s8 %v276
        %v278 = vlaneseq
        %v279 = vshrl.u32 %v278, 7
        %v280 = vsub.s32 %v277, %v279
        %v281 = vrot.slane %v271, %v280
        %v282 = vcombine.high %v281, %v281
        %283 = vrot.lane.b32.xlu0 %v281, 126
        %v284 = vpop.permute.xlu0 %283
        %285 = vrot.lane.b32.xlu0 %v282, 126
        %v286 = vpop.permute.xlu0 %285
        %vm287 = vcmask 1031168
        %v288 = vsel %vm287, %v284, %v286
        %v290 = vsel %vm177, %v273, 0
        %v293 = vsel %vm181, %v288, 0
        %295 = vmatprep.subr.bf16.mxu0 0
        %296 = vmatpush1.bf16.msra.mxu0 %v293
        %297 = vmatprep.subr.bf16.mxu0 0
        %298 = vmatpush1.bf16.msra.mxu0 0
        %299 = vmatprep.subr.bf16.mxu0 0
        %300 = vmatpush1.bf16.msra.mxu0 0
        %301 = vmatprep.subr.bf16.mxu0 0
        %302 = vmatpush1.bf16.msra.mxu0 0
        %303 = vmatprep.subr.bf16.mxu0 0
        %304 = vmatpush1.bf16.msra.mxu0 0
        %305 = vmatprep.subr.bf16.mxu0 0
        %306 = vmatpush1.bf16.msra.mxu0 0
        %307 = vmatprep.subr.bf16.mxu0 0
        %308 = vmatpush1.bf16.msra.mxu0 0
        %309 = vmatprep.subr.bf16.mxu0 0
        %310 = vmatpush1.bf16.msra.mxu0 0
        %311 = vmatprep.subr.bf16.mxu0 0
        %312 = vmatpush1.bf16.msra.mxu0 0
        %313 = vmatprep.subr.bf16.mxu0 0
        %314 = vmatpush1.bf16.msra.mxu0 0
        %315 = vmatprep.subr.bf16.mxu0 0
        %316 = vmatpush1.bf16.msra.mxu0 0
        %317 = vmatprep.subr.bf16.mxu0 0
        %318 = vmatpush1.bf16.msra.mxu0 0
        %319 = vmatprep.subr.bf16.mxu0 0
        %320 = vmatpush1.bf16.msra.mxu0 0
        %321 = vmatprep.subr.bf16.mxu0 0
        %322 = vmatpush1.bf16.msra.mxu0 0
        %323 = vmatprep.subr.bf16.mxu0 0
        %324 = vmatpush1.bf16.msra.mxu0 0
        %325 = vmatprep.subr.bf16.mxu0 0
        %326 = vmatpush1.bf16.msra.mxu0 0
        %327 = vmatprep.mubr.bf16.mxu0 0
        %328 = vmatmul.mubr.bf16.gmra.mrb[0].mxu0 %v290
        %v329 = vpop.f32.mrb[0].mxu0
        %v330 = vadd.f32 0.0, %v329
        %v331 = vpop.f32.mrb[0].mxu0
        %v332 = vpop.f32.mrb[0].mxu0
        %v333 = vpop.f32.mrb[0].mxu0
        %334 = vdwg.mxu0
        %v335 = vadd.f32 %v266, %v330
        %336 = vst [vmem:[%s150] sm:$0xff] %v335
        %s337 = sand.u32 %s85, 1
        %s338 = scalar_lea.sflag [#allocation3], %s337
        %s339 = sand.u32 %s85, 1
        %s340 = smul.addr %s339, 8
        %s341 = scalar_lea.vmem [#allocation2], %s340
        // Predicated region
        $region29: #{tpu_custom_call.1} parent=27 // pred_check
          %p342 = pneg %p95
        $region30: #{tpu_custom_call.1} parent=27 // pred_check_branch
          %344 = sbr.rel (%p342) target = $region32
        $region31: #{tpu_custom_call.1} parent=27 // pred_region
          %s346 = ssub.s32 128, 128
          %347 = vsyncadd %s338, %s346
          %s348 = sadd.s32 %s21, %s20
          %s349 = smul.addr %s348, 128
          %s350 = scalar_lea.hbm %s2, %s349
          %s352 = sshll.u32 %s341, 4
          %s353 = int_to_ptr.vmem [resolvable:$true] %s352
          %355 = dma.vmem_to_hbm [thread:$0]  %s353, 128, %s350, %s338
        $region32: #{tpu_custom_call.1} parent=27 // pred_fallthru
          _
      $region28: #{tpu_custom_call.1} parent=5 // pred_fallthru
        _
      %p356 = scmp.le.s32.totalorder 2, %s11
      // Predicated region
      $region33: #{tpu_custom_call.1} parent=5 // pred_check
        %p357 = pneg %p356
      $region34: #{tpu_custom_call.1} parent=5 // pred_check_branch
        %359 = sbr.rel (%p357) target = $region36
      $region35: #{tpu_custom_call.1} parent=5 // pred_region
        %s360 = ssub.s32 %s11, 2
        // Predicated region
        $region37: #{tpu_custom_call.1} parent=35 // pred_check
          %p361 = pneg %p101
        $region38: #{tpu_custom_call.1} parent=35 // pred_check_branch
          %363 = sbr.rel (%p361) target = $region40
        $region39: #{tpu_custom_call.1} parent=35 // pred_region
          %s364 = sand.u32 %s86, 1
          %s365 = scalar_lea.sflag [#allocation3], %s364
          %s366 = sand.u32 %s86, 1
          %s367 = smul.addr %s366, 8
          %s368 = scalar_lea.vmem [#allocation2], %s367
          %369 = dma.done %s365, 128
        $region40: #{tpu_custom_call.1} parent=35 // pred_fallthru
          _
      $region36: #{tpu_custom_call.1} parent=5 // pred_fallthru
        _
    $region6: #{tpu_custom_call.1} parent=1 // loop_footer
      %s15 = sadd.s32 1, %s11
    $region7: #{tpu_custom_call.1} parent=1 // loop_footer_branch
      %10 = sbr.rel target = $region3
    $region8: #{tpu_custom_call.1} parent=1 // loop_exit
      _
    %370 = vsyncpa [#allocation3], 1
    %s371 = scalar_lea.sflag [#allocation3], 1
    %372 = vsyncpa %s371, 1

</llo_original>
